<compile_context>
chip_gen: v7x
topology: tpu7x:2x2x1
jax: 0.10.0
libtpu: 0.0.40
codegen_flags: <defaults>
</compile_context>

<pallas_src>
import functools

import jax
import jax.numpy as jnp
from jax import lax
from jax.experimental import pallas as pl
from jax.experimental.pallas import tpu as pltpu


def _dot_graph_kernel(x_ref, wt_ref, b_ref, out_ref, h_ref, *, n_valid):
    """One (TM, N_pad) row stripe of the adjacency for the current batch.

    x_ref  : (N_pad, D)    input features for this batch (padded rows are 0)
    wt_ref : (D, D)        pre-transposed linear weight (W^T)
    b_ref  : (1, D)        bias
    out_ref: (TM, N_pad)   adjacency stripe
    h_ref  : (N_pad, D)    scratch holding the mapped features (staged once/batch)
    """
    r = pl.program_id(1)
    tm, n = out_ref.shape

    # Stage h = x @ W^T + b once per batch (row tile 0). Accumulate in f32 on
    # the MXU; store in the scratch dtype (bf16 when the inputs are bf16).
    @pl.when(r == 0)
    def _():
        h = jnp.dot(x_ref[...], wt_ref[...], preferred_element_type=jnp.float32)
        h = h + b_ref[...].astype(jnp.float32)
        h_ref[...] = h.astype(h_ref.dtype)

    row_start = pl.multiple_of(r * tm, tm)
    h_rows = h_ref[pl.ds(row_start, tm), :]       # (TM, D)
    h_all = h_ref[...]                            # (N_pad, D)

    # Adj stripe = h_rows @ h_all^T without materializing the transpose:
    # contract the D axis of both operands directly on the MXU.
    adj = lax.dot_general(
        h_rows, h_all,
        dimension_numbers=(((1,), (1,)), ((), ())),
        preferred_element_type=jnp.float32,
    )                                             # (TM, N_pad) f32

    row = lax.broadcasted_iota(jnp.int32, (tm, n), 0) + row_start
    col = lax.broadcasted_iota(jnp.int32, (tm, n), 1)
    is_diag = row == col

    # Adj = leaky_relu(Adj - 1e8 * I)   (default negative_slope = 0.01),
    # without materializing an (N, N) identity matrix.
    adj = jnp.where(is_diag, adj - 1.0e8, adj)
    adj = jnp.where(adj >= 0.0, adj, 0.01 * adj)

    # Padded columns must not contribute to the row softmax.
    if n_valid < n:
        adj = jnp.where(col < n_valid, adj, -1.0e30)

    # Row-wise softmax: each row is fully resident in this stripe.
    m = jnp.max(adj, axis=-1, keepdims=True)
    p = jnp.exp(adj - m)
    denom = jnp.sum(p, axis=-1, keepdims=True)
    # Exact reciprocal of the (TM, 1) row sums (cheap). The approximate EUP
    # reciprocal (pl.reciprocal(..., approx=True)) cost ~2e-3 accuracy in the
    # normalized rows and failed the correctness check.
    adj = p * (1.0 / denom)

    # Adj = Adj + I
    out_ref[...] = jnp.where(is_diag, adj + 1.0, adj).astype(out_ref.dtype)


def _vmem_capacity_bytes():
    """Physical VMEM per TensorCore; conservative 64 MiB (v7x) if unknown."""
    try:
        return int(pltpu.get_tpu_info().vmem_capacity_bytes)
    except Exception:
        return 64 << 20


def _need_bytes(tm, n_pad, d, x_b, h_b, o_b):
    """VMEM footprint estimate for one grid step (double-buffered pipeline)."""
    return (2 * n_pad * d * x_b        # x slab (double-buffered input)
            + 2 * d * d * x_b          # W^T (double-buffered)
            + 2 * d * x_b              # bias
            + n_pad * d * h_b          # staged h scratch
            + 2 * tm * n_pad * o_b     # output stripes (double-buffered)
            + 3 * tm * n_pad * 4       # softmax temporaries (adj, p, mask)
            + (2 << 20))               # slack


def _choose_row_tile(n_pad, d, x_b, h_b, o_b, budget, max_tm):
    """Largest multiple-of-8 divisor of n_pad (<= max_tm) that fits `budget`."""
    best = None
    cap = min(max_tm, n_pad)
    tm = 8
    while tm <= cap:
        if n_pad % tm == 0 and _need_bytes(tm, n_pad, d, x_b, h_b, o_b) <= budget:
            best = tm
        tm += 8
    if best is not None:
        return best
    # Nothing fits the budget: fall back to the smallest multiple-of-8 divisor.
    for tm in range(8, n_pad + 1, 8):
        if n_pad % tm == 0:
            return tm
    return n_pad


def dot_graph_construction(node_features, weight, bias, *,
                           out_dtype=jnp.float32, max_row_tile=512):
    """node_features: (bs, N, D); weight: (D, D) torch (out, in) layout; bias: (D,).

    Returns the softmax-normalized adjacency (bs, N, N) in `out_dtype`
    (pass jnp.bfloat16 to halve the HBM writeback of the N^2 output when the
    consumer tolerates it).
    """
    bs, N, D = node_features.shape
    in_dtype = node_features.dtype

    # Keep both staging-matmul operands in the input dtype so bf16 activations
    # stay on the fast bf16 MXU path (no silent f32 promotion).
    wt = weight.T.astype(in_dtype)                # (D_in, D_out)
    bias2d = bias.reshape(1, D).astype(in_dtype)
    h_dtype = jnp.bfloat16 if in_dtype == jnp.bfloat16 else jnp.float32

    # Pad N up to a multiple of 128 so the (TM, N_pad) output stripes are
    # lane-dense (unmasked vst) and row tiles divide cleanly.
    n_pad = -(-N // 128) * 128
    x = node_features
    if n_pad != N:
        x = jnp.pad(x, ((0, 0), (0, n_pad - N), (0, 0)))

    # Generation-aware VMEM budgeting (v5e/v6e: 128 MiB, v7x: 64 MiB).
    capacity = _vmem_capacity_bytes()
    budget = capacity - (8 << 20)

    x_b = jnp.dtype(in_dtype).itemsize
    h_b = jnp.dtype(h_dtype).itemsize
    o_b = jnp.dtype(out_dtype).itemsize

    tm = _choose_row_tile(n_pad, D, x_b, h_b, o_b, budget, max_row_tile)
    n_row_tiles = n_pad // tm

    need = _need_bytes(tm, n_pad, D, x_b, h_b, o_b)
    vmem_limit = int(min(max(need, 32 << 20), capacity - (4 << 20)))

    grid_spec = pltpu.PrefetchScalarGridSpec(
        num_scalar_prefetch=0,
        grid=(bs, n_row_tiles),
        in_specs=[
            # One full (N_pad, D) batch slab; invariant across the row-tile
            # axis so it is only re-DMA'd when the batch index changes.
            pl.BlockSpec((None, n_pad, D), lambda b, r: (b, 0, 0)),
            pl.BlockSpec((D, D), lambda b, r: (0, 0)),      # W^T (whole)
            pl.BlockSpec((1, D), lambda b, r: (0, 0)),      # bias
        ],
        out_specs=pl.BlockSpec((None, tm, n_pad), lambda b, r: (b, r, 0)),
        scratch_shapes=[pltpu.VMEM((n_pad, D), h_dtype)],    # staged h
    )

    cost = pl.CostEstimate(
        flops=int(bs * (2 * n_pad * D * D + 2 * n_pad * n_pad * D)),
        transcendentals=int(bs * n_pad * n_pad),
        bytes_accessed=int(bs * n_pad * D * x_b + D * D * x_b
                           + bs * n_pad * n_pad * o_b),
    )

    kernel = functools.partial(_dot_graph_kernel, n_valid=int(N))
    adj = pl.pallas_call(
        kernel,
        out_shape=jax.ShapeDtypeStruct((bs, n_pad, n_pad), out_dtype),
        grid_spec=grid_spec,
        compiler_params=pltpu.CompilerParams(
            # Row tiles share the per-batch h scratch -> keep them sequential;
            # batches are independent (megacore-shardable).
            dimension_semantics=("parallel", "arbitrary"),
            vmem_limit_bytes=vmem_limit,
        ),
        cost_estimate=cost,
    )(x, wt, bias2d)

    if n_pad != N:
        adj = adj[:, :N, :N]
    return adj


def _reference(node_features, weight, bias):
    # Pure-JAX reference mirroring the PyTorch forward.
    h = jnp.einsum("bnd,od->bno", node_features, weight) + bias
    adj = jnp.einsum("bnd,bmd->bnm", h, h)
    eye = jnp.eye(h.shape[1], dtype=h.dtype)[None]
    adj = adj - eye * 1.0e8
    adj = jnp.where(adj >= 0, adj, 0.01 * adj)
    adj = jax.nn.softmax(adj, axis=-1)
    return adj + eye


if __name__ == "__main__":
    bs, N, D = 2, 8, 32

    key = jax.random.PRNGKey(0)
    kx, kw, kb = jax.random.split(key, 3)

    node_features = jax.random.normal(kx, (bs, N, D), dtype=jnp.float32)
    # Deterministic "nn.Linear(input_dim, input_dim)" params (torch-style uniform).
    bound = 1.0 / (D ** 0.5)
    weight = jax.random.uniform(kw, (D, D), minval=-bound, maxval=bound,
                                dtype=jnp.float32)   # (out, in)
    bias = jax.random.uniform(kb, (D,), minval=-bound, maxval=bound,
                              dtype=jnp.float32)

    out = dot_graph_construction(node_features, weight, bias)
    out = jax.block_until_ready(out)

    ref = _reference(node_features, weight, bias)
    assert out.shape == (bs, N, N), out.shape
    max_err = float(jnp.max(jnp.abs(out - ref)))
    # Tolerance accounts for the MXU's default-precision matmul path on real
    # hardware; the interpret-mode error is ~1e-6 after the reciprocal fix.
    assert jnp.allclose(out, ref, atol=1e-3, rtol=1e-3), max_err

    print("KERNEL_OK")
</pallas_src>

<mosaic_0001>
module attributes {stable_mosaic.version = 11 : i64} {
  func.func @_dot_graph_kernel(%arg0: i32, %arg1: i32, %arg2: memref<1x128x32xf32, #tpu.memory_space<vmem>>, %arg3: memref<32x32xf32, #tpu.memory_space<vmem>>, %arg4: memref<1x32xf32, #tpu.memory_space<vmem>>, %arg5: memref<1x128x128xf32, #tpu.memory_space<vmem>>, %arg6: memref<128x32xf32, #tpu.memory_space<vmem>>) attributes {dimension_semantics = [#tpu.dimension_semantics<parallel>, #tpu.dimension_semantics<arbitrary>], iteration_bounds = array<i64: 2, 1>, scalar_prefetch = 0 : i64, scratch_operands = 1 : i64, tpu.core_type = #tpu.core_type<tc>, window_params = [{transform_indices = @transform_0, window_bounds = array<i64: 1, 128, 32>}, {pipeline_mode = #tpu.pipeline_mode<synchronous>, transform_indices = @transform_1, window_bounds = array<i64: 32, 32>}, {pipeline_mode = #tpu.pipeline_mode<synchronous>, transform_indices = @transform_2, window_bounds = array<i64: 1, 32>}, {transform_indices = @transform_3, window_bounds = array<i64: 1, 128, 128>}]} {
    %c0_i32 = arith.constant 0 : i32
    %0 = arith.cmpi eq, %arg1, %c0_i32 : i32
    %1 = arith.extui %0 : i1 to i32
    %c0_i32_0 = arith.constant 0 : i32
    %2 = arith.cmpi ne, %1, %c0_i32_0 : i32
    scf.if %2 {
      %c0_14 = arith.constant 0 : index
      %c0_15 = arith.constant 0 : index
      %c0_16 = arith.constant 0 : index
      %43 = vector.load %arg2[%c0_14, %c0_15, %c0_16] : memref<1x128x32xf32, #tpu.memory_space<vmem>>, vector<1x128x32xf32>
      %44 = vector.shape_cast %43 : vector<1x128x32xf32> to vector<128x32xf32>
      %c0_17 = arith.constant 0 : index
      %c0_18 = arith.constant 0 : index
      %45 = vector.load %arg3[%c0_17, %c0_18] : memref<32x32xf32, #tpu.memory_space<vmem>>, vector<32x32xf32>
      %cst_19 = arith.constant dense<0.000000e+00> : vector<128x32xf32>
      %46 = tpu.matmul %44, %45, %cst_19 {dimension_numbers = #tpu.dot_dimension_numbers<[1], [0], [0], [1], [0, 0, 1, 1], [], []>} : vector<128x32xf32>, vector<32x32xf32>, vector<128x32xf32> -> vector<128x32xf32>
      %c0_20 = arith.constant 0 : index
      %c0_21 = arith.constant 0 : index
      %47 = vector.load %arg4[%c0_20, %c0_21] : memref<1x32xf32, #tpu.memory_space<vmem>>, vector<1x32xf32>
      %48 = vector.broadcast %47 : vector<1x32xf32> to vector<128x32xf32>
      %49 = arith.addf %46, %48 : vector<128x32xf32>
      %c0_22 = arith.constant 0 : index
      %c0_23 = arith.constant 0 : index
      %50 = vector.load %arg6[%c0_22, %c0_23] : memref<128x32xf32, #tpu.memory_space<vmem>>, vector<128x32xf32>
      tpu.vector_store %arg6[%c0_22, %c0_23], %49 {strides = array<i32>} : memref<128x32xf32, #tpu.memory_space<vmem>>, vector<128x32xf32>,
    } else {
    }
    %c128_i32 = arith.constant 128 : i32
    %3 = arith.muli %arg1, %c128_i32 : i32
    %4 = tpu.assume_multiple %3, 128 : i32
    %5 = arith.index_cast %4 : i32 to index
    %c0 = arith.constant 0 : index
    %6 = vector.load %arg6[%5, %c0] : memref<128x32xf32, #tpu.memory_space<vmem>>, vector<128x32xf32>
    %c0_1 = arith.constant 0 : index
    %c0_2 = arith.constant 0 : index
    %7 = vector.load %arg6[%c0_1, %c0_2] : memref<128x32xf32, #tpu.memory_space<vmem>>, vector<128x32xf32>
    %cst = arith.constant dense<0.000000e+00> : vector<128x128xf32>
    %8 = tpu.matmul %6, %7, %cst {dimension_numbers = #tpu.dot_dimension_numbers<[1], [1], [0], [0], [0, 0, 1, 0], [], []>} : vector<128x32xf32>, vector<128x32xf32>, vector<128x128xf32> -> vector<128x128xf32>
    %9 = tpu.iota {dimensions = array<i32: 0>} : vector<128x128xi32>
    %10 = vector.broadcast %4 : i32 to vector<128x128xi32>
    %11 = arith.addi %9, %10 : vector<128x128xi32>
    %12 = tpu.iota {dimensions = array<i32: 1>} : vector<128x128xi32>
    %13 = arith.cmpi eq, %11, %12 : vector<128x128xi32>
    %cst_3 = arith.constant 1.000000e+08 : f32
    %14 = vector.broadcast %cst_3 : f32 to vector<128x128xf32>
    %15 = arith.subf %8, %14 : vector<128x128xf32>
    %16 = arith.select %13, %15, %8 : vector<128x128xi1>, vector<128x128xf32>
    %cst_4 = arith.constant 0.000000e+00 : f32
    %17 = vector.broadcast %cst_4 : f32 to vector<128x128xf32>
    %18 = arith.cmpf oge, %16, %17 : vector<128x128xf32>
    %cst_5 = arith.constant 0.00999999977 : f32
    %19 = vector.broadcast %cst_5 : f32 to vector<128x128xf32>
    %20 = arith.mulf %19, %16 : vector<128x128xf32>
    %21 = arith.select %18, %16, %20 : vector<128x128xi1>, vector<128x128xf32>
    %c8_i32 = arith.constant 8 : i32
    %22 = vector.broadcast %c8_i32 : i32 to vector<128x128xi32>
    %23 = arith.cmpi slt, %12, %22 : vector<128x128xi32>
    %cst_6 = arith.constant -1.000000e+30 : f32
    %24 = vector.broadcast %cst_6 : f32 to vector<128x128xf32>
    %25 = arith.select %23, %21, %24 : vector<128x128xi1>, vector<128x128xf32>
    %cst_7 = arith.constant dense<0xFF800000> : vector<128xf32>
    %26 = vector.multi_reduction <maximumf>, %25, %cst_7 [1] : vector<128x128xf32> to vector<128xf32>
    %27 = vector.shape_cast %26 : vector<128xf32> to vector<128x1xf32>
    %28 = vector.broadcast %27 : vector<128x1xf32> to vector<128x128xf32>
    %29 = arith.subf %25, %28 : vector<128x128xf32>
    %30 = math.exp %29 : vector<128x128xf32>
    %cst_8 = arith.constant dense<0.000000e+00> : vector<128xf32>
    %31 = vector.multi_reduction <add>, %30, %cst_8 [1] : vector<128x128xf32> to vector<128xf32>
    %32 = vector.shape_cast %31 : vector<128xf32> to vector<128x1xf32>
    %cst_9 = arith.constant 1.000000e+00 : f32
    %33 = vector.broadcast %cst_9 : f32 to vector<128x1xf32>
    %34 = arith.divf %33, %32 : vector<128x1xf32>
    %35 = vector.broadcast %34 : vector<128x1xf32> to vector<128x128xf32>
    %36 = arith.mulf %30, %35 : vector<128x128xf32>
    %cst_10 = arith.constant 1.000000e+00 : f32
    %37 = vector.broadcast %cst_10 : f32 to vector<128x128xf32>
    %38 = arith.addf %36, %37 : vector<128x128xf32>
    %39 = arith.select %13, %38, %36 : vector<128x128xi1>, vector<128x128xf32>
    %c0_11 = arith.constant 0 : index
    %c0_12 = arith.constant 0 : index
    %c0_13 = arith.constant 0 : index
    %40 = vector.load %arg5[%c0_11, %c0_12, %c0_13] : memref<1x128x128xf32, #tpu.memory_space<vmem>>, vector<1x128x128xf32>
    %41 = vector.shape_cast %40 : vector<1x128x128xf32> to vector<128x128xf32>
    %42 = vector.shape_cast %39 : vector<128x128xf32> to vector<1x128x128xf32>
    tpu.vector_store %arg5[%c0_11, %c0_12, %c0_13], %42 {strides = array<i32>} : memref<1x128x128xf32, #tpu.memory_space<vmem>>, vector<1x128x128xf32>,
    return
  }
  func.func @transform_0(%arg0: i32, %arg1: i32) -> (i32, i32, i32) {
    %c0_i32 = arith.constant 0 : i32
    %c0_i32_0 = arith.constant 0 : i32
    %c0_i32_1 = arith.constant 0 : i32
    return %arg0, %c0_i32, %c0_i32_0 : i32, i32, i32
  }
  func.func @transform_1(%arg0: i32, %arg1: i32) -> (i32, i32) {
    %c0_i32 = arith.constant 0 : i32
    %c0_i32_0 = arith.constant 0 : i32
    %c0_i32_1 = arith.constant 0 : i32
    return %c0_i32, %c0_i32_0 : i32, i32
  }
  func.func @transform_2(%arg0: i32, %arg1: i32) -> (i32, i32) {
    %c0_i32 = arith.constant 0 : i32
    %c0_i32_0 = arith.constant 0 : i32
    %c0_i32_1 = arith.constant 0 : i32
    return %c0_i32, %c0_i32_0 : i32, i32
  }
  func.func @transform_3(%arg0: i32, %arg1: i32) -> (i32, i32, i32) {
    %c0_i32 = arith.constant 0 : i32
    %c0_i32_0 = arith.constant 0 : i32
    return %arg0, %arg1, %c0_i32 : i32, i32, i32
  }
}

</mosaic_0001>

<llo_original>
// kernel: tpu_custom_call.1
$region0: #{tpu_custom_call.1}
  #allocation0 [shape = 'u32[]', space=smem, size = 0x4, offset = 0x4, fixed_abs, tag = 'smem constant byte address 0x4 - core index']
  #allocation1 [shape = 'u32[144,128]{1,0:T(1,128)}', space=vmem, size = 0x12000, scoped, tag = 'internal scratch']
  #allocation2 [shape = 'f32[128,32]{1,0:T(8,128)}', space=vmem, size = 0x10000, scoped, tag = 'scratch operand']
  %s0 = inlined_call_operand.vmem [shape: f32[2,128,32], index: 0, kind: input, shape index: {}]
  %s1 = inlined_call_operand.vmem [shape: f32[32,32], index: 1, kind: input, shape index: {}]
  %s2 = inlined_call_operand.vmem [shape: f32[1,32], index: 2, kind: input, shape index: {}]
  %s3 = inlined_call_operand.hbm [shape: f32[2,128,128], index: 3, kind: output, shape index: {}]
  %s4 = sld [smem:[#allocation0]]
  $region49: #{tpu_custom_call.1} parent=0
    _
  %s6 = ssub.s32 1, %s4
  %s7 = scalar_select 0, %s6, %s4
  $region1: #{tpu_custom_call.1} parent=0
    #allocation3 [shape = 'u8[131072]{0}', space=vmem, size = 0x20000, scoped, tag = 'output window, operand 0']
    #allocation4 [shape = 's32[2]{0}', space=sflag, size = 0x8, scoped, tag = 'scoped memory for tpu_custom_call.1']
    %8 = vsyncpa [#allocation4], 0
    %s9 = scalar_lea.sflag [#allocation4], 1
    %10 = vsyncpa %s9, 0
    loop: start=0, step=1, limit=4
    $region2: #{tpu_custom_call.1} parent=1 // loop_pre_header
      _
    $region3: #{tpu_custom_call.1} parent=1 // loop_header
      %s12 = sphi 0, %s16
      %p13 = scmp.ge.s32.totalorder %s12, 4
      %s19 = sphi 0, %s31
      %s20 = sphi 0, %s27
      %s21 = sphi 0, %s19
      %s22 = sphi 0, %s20
      %s23 = sphi 0, %s21
      %s24 = sphi 0, %s22
      %s34 = sphi 0, %s36
      %s37 = sphi 0, %s34
      %s38 = sphi 0, %s37
      %s54 = sphi 0, %s38
      %s58 = sphi 0, %s58
      %s60 = sphi 0, %s58
      %s61 = sphi 0, %s60
      %s75 = sphi 0, %s61
      %s79 = sphi 0, %s79
      %s81 = sphi 0, %s79
      %s82 = sphi 0, %s81
      %s96 = sphi 0, %s82
      %s104 = sphi 0, %s106
      %s107 = sphi 0, %s104
      %s108 = sphi 0, %s107
      %s124 = sphi 0, %s108
    $region4: #{tpu_custom_call.1} parent=1 // loop_header_branch
      %15 = sbr.rel (%p13) target = $region8
    $region5: #{tpu_custom_call.1} parent=1 // loop_body
      %s17 = ssub.s32 %s12, 1
      %s18 = ssub.s32 %s12, 2
      %s25 = sadd.s32 1, %s20
      %p26 = scmp.ge.s32.totalorder %s25, 1
      %s27 = scalar_select %p26, 0, %s25
      %s28 = sadd.s32 1, %s19
      %s29 = scalar_select %p26, %s28, %s19
      %p30 = scmp.ge.s32.totalorder %s29, 2
      %s31 = scalar_select %p30, 0, %s29
      %s32 = ssub.s32 %s19, %s31
      %p33 = scmp.eq.s32.totalorder %s32, 0
      %s35 = sadd.s32 %s34, 1
      %s36 = scalar_select %p33, %s34, %s35
      %p39 = pneg %p33
      %p40 = scmp.eq.s32.totalorder %s12, 1
      %p41 = por %p39, %p40
      %p42 = scmp.ne.s32.totalorder %s34, %s37
      %p43 = scmp.eq.s32.totalorder %s12, 0
      %p44 = por %p42, %p43
      %p45 = scmp.ne.s32.totalorder %s34, %s37
      %p46 = scmp.eq.s32.totalorder %s17, 1
      %p47 = por %p45, %p46
      %p48 = scmp.ne.s32.totalorder %s37, %s38
      %p49 = scmp.eq.s32.totalorder %s17, 0
      %p50 = por %p48, %p49
      %p51 = scmp.ne.s32.totalorder %s37, %s38
      %p52 = scmp.eq.s32.totalorder %s18, 1
      %p53 = por %p51, %p52
      %p55 = scmp.ne.s32.totalorder %s38, %s54
      %p56 = scmp.eq.s32.totalorder %s18, 0
      %p57 = por %p55, %p56
      %s59 = sadd.s32 %s58, 1
      %p62 = scmp.eq.s32.totalorder %s12, 1
      %p63 = scmp.ne.s32.totalorder %s58, %s60
      %p64 = scmp.eq.s32.totalorder %s12, 0
      %p65 = por %p63, %p64
      %p66 = scmp.ne.s32.totalorder %s58, %s60
      %p67 = scmp.eq.s32.totalorder %s17, 1
      %p68 = por %p66, %p67
      %p69 = scmp.ne.s32.totalorder %s60, %s61
      %p70 = scmp.eq.s32.totalorder %s17, 0
      %p71 = por %p69, %p70
      %p72 = scmp.ne.s32.totalorder %s60, %s61
      %p73 = scmp.eq.s32.totalorder %s18, 1
      %p74 = por %p72, %p73
      %p76 = scmp.ne.s32.totalorder %s61, %s75
      %p77 = scmp.eq.s32.totalorder %s18, 0
      %p78 = por %p76, %p77
      %s80 = sadd.s32 %s79, 1
      %p83 = scmp.eq.s32.totalorder %s12, 1
      %p84 = scmp.ne.s32.totalorder %s79, %s81
      %p85 = scmp.eq.s32.totalorder %s12, 0
      %p86 = por %p84, %p85
      %p87 = scmp.ne.s32.totalorder %s79, %s81
      %p88 = scmp.eq.s32.totalorder %s17, 1
      %p89 = por %p87, %p88
      %p90 = scmp.ne.s32.totalorder %s81, %s82
      %p91 = scmp.eq.s32.totalorder %s17, 0
      %p92 = por %p90, %p91
      %p93 = scmp.ne.s32.totalorder %s81, %s82
      %p94 = scmp.eq.s32.totalorder %s18, 1
      %p95 = por %p93, %p94
      %p97 = scmp.ne.s32.totalorder %s82, %s96
      %p98 = scmp.eq.s32.totalorder %s18, 0
      %p99 = por %p97, %p98
      %s100 = ssub.s32 %s19, %s31
      %s101 = ssub.s32 %s20, %s27
      %s102 = sor.u32 %s100, %s101
      %p103 = scmp.eq.s32.totalorder %s102, 0
      %s105 = sadd.s32 %s104, 1
      %s106 = scalar_select %p103, %s104, %s105
      %p109 = pneg %p103
      %p110 = scmp.eq.s32.totalorder %s12, 1
      %p111 = por %p109, %p110
      %p112 = scmp.ne.s32.totalorder %s104, %s107
      %p113 = scmp.eq.s32.totalorder %s12, 0
      %p114 = por %p112, %p113
      %p115 = scmp.ne.s32.totalorder %s104, %s107
      %p116 = scmp.eq.s32.totalorder %s17, 1
      %p117 = por %p115, %p116
      %p118 = scmp.ne.s32.totalorder %s107, %s108
      %p119 = scmp.eq.s32.totalorder %s17, 0
      %p120 = por %p118, %p119
      %p121 = scmp.ne.s32.totalorder %s107, %s108
      %p122 = scmp.eq.s32.totalorder %s18, 1
      %p123 = por %p121, %p122
      %p125 = scmp.ne.s32.totalorder %s108, %s124
      %p126 = scmp.eq.s32.totalorder %s18, 0
      %p127 = por %p125, %p126
      %p128 = scmp.le.s32.totalorder 1, %s12
      %p129 = scmp.lt.s32.totalorder %s12, 3
      %p130 = pnand %p128, %p129
      %p131 = pneg %p130
      // Predicated region
      $region9: #{tpu_custom_call.1} parent=5 // pred_check
        _
      $region10: #{tpu_custom_call.1} parent=5 // pred_check_branch
        %133 = sbr.rel (%p130) target = $region12
      $region11: #{tpu_custom_call.1} parent=5 // pred_region
        %s134 = ssub.s32 %s12, 1
        // Predicated region
        $region13: #{tpu_custom_call.1} parent=11 // pred_check
          %p135 = pneg %p71
        $region14: #{tpu_custom_call.1} parent=11 // pred_check_branch
          %137 = sbr.rel (%p135) target = $region16
        $region15: #{tpu_custom_call.1} parent=11 // pred_region
          _
        $region16: #{tpu_custom_call.1} parent=11 // pred_fallthru
          _
        // Predicated region
        $region17: #{tpu_custom_call.1} parent=11 // pred_check
          %p138 = pneg %p92
        $region18: #{tpu_custom_call.1} parent=11 // pred_check_branch
          %140 = sbr.rel (%p138) target = $region20
        $region19: #{tpu_custom_call.1} parent=11 // pred_region
          _
        $region20: #{tpu_custom_call.1} parent=11 // pred_fallthru
          _
      $region12: #{tpu_custom_call.1} parent=5 // pred_fallthru
        _
      %p141 = scmp.lt.s32.totalorder %s12, 2
      // Predicated region
      $region21: #{tpu_custom_call.1} parent=5 // pred_check
        %p142 = pneg %p141
      $region22: #{tpu_custom_call.1} parent=5 // pred_check_branch
        %144 = sbr.rel (%p142) target = $region24
      $region23: #{tpu_custom_call.1} parent=5 // pred_region
        // Predicated region
        $region25: #{tpu_custom_call.1} parent=23 // pred_check
          %p145 = pneg %p44
        $region26: #{tpu_custom_call.1} parent=23 // pred_check_branch
          %147 = sbr.rel (%p145) target = $region28
        $region27: #{tpu_custom_call.1} parent=23 // pred_region
          %p148 = scmp.lt.s32.totalorder %s19, 1
          %s149 = scalar_select %p148, %s19, 1
          %s150 = smul.addr %s149, 16
          %s151 = smul.addr %s150, 8
          %s152 = scalar_lea.vmem %s0, %s151
        $region28: #{tpu_custom_call.1} parent=23 // pred_fallthru
          _
      $region24: #{tpu_custom_call.1} parent=5 // pred_fallthru
        _
      %p153 = scmp.le.s32.totalorder 1, %s12
      %p154 = scmp.lt.s32.totalorder %s12, 3
      %p155 = pnand %p153, %p154
      %p156 = pneg %p155
      // Predicated region
      $region29: #{tpu_custom_call.1} parent=5 // pred_check
        _
      $region30: #{tpu_custom_call.1} parent=5 // pred_check_branch
        %158 = sbr.rel (%p155) target = $region32
      $region31: #{tpu_custom_call.1} parent=5 // pred_region
        %s159 = ssub.s32 %s12, 1
        %p160 = scmp.lt.s32.totalorder %s21, 1
        %s161 = scalar_select %p160, %s21, 1
        %s162 = smul.addr %s161, 16
        %s163 = smul.addr %s162, 8
        %s164 = scalar_lea.vmem %s0, %s163
        %p165 = pneg %p50
        %p166 = pneg %p47
        %p167 = pneg %p71
        %p168 = pneg %p68
        %p169 = pneg %p92
        %p170 = pneg %p89
        %p171 = pneg %p120
        %p172 = pneg %p117
        %s173 = sand.u32 %s107, 1
        %s174 = scalar_lea.sflag [#allocation4], %s173
        %s175 = sand.u32 %s107, 1
        %s176 = smul.addr %s175, 128
        %s177 = scalar_lea.vmem [#allocation3], %s176
        %p178 = scmp.lt.s32.totalorder %s21, 1
        %s179 = scalar_select %p178, %s21, 1
        %s180 = smul.addr %s179, 16
        %s181 = smul.addr %s180, 8
        %s182 = scalar_lea.vmem %s0, %s181
        %s183 = smul.u32 16, %s22
        %p184 = scmp.eq.s32.totalorder %s22, 0
        // Predicated region
        $region33: #{tpu_custom_call.1} parent=31 // pred_check
          %p185 = pneg %p184
        $region34: #{tpu_custom_call.1} parent=31 // pred_check_branch
          %187 = sbr.rel (%p185) target = $region36
        $region35: #{tpu_custom_call.1} parent=31 // pred_region
          %v188 = vld [vmem:[%s182] sm:$0xff]
          %v189 = vld [vmem:[%s182 + $0x8] sm:$0xff]
          %v190 = vld [vmem:[%s182 + $0x10] sm:$0xff]
          %v191 = vld [vmem:[%s182 + $0x18] sm:$0xff]
          %v192 = vld [vmem:[%s182 + $0x20] sm:$0xff]
          %v193 = vld [vmem:[%s182 + $0x28] sm:$0xff]
          %v194 = vld [vmem:[%s182 + $0x30] sm:$0xff]
          %v195 = vld [vmem:[%s182 + $0x38] sm:$0xff]
          %v196 = vld [vmem:[%s182 + $0x40] sm:$0xff]
          %v197 = vld [vmem:[%s182 + $0x48] sm:$0xff]
          %v198 = vld [vmem:[%s182 + $0x50] sm:$0xff]
          %v199 = vld [vmem:[%s182 + $0x58] sm:$0xff]
          %v200 = vld [vmem:[%s182 + $0x60] sm:$0xff]
          %v201 = vld [vmem:[%s182 + $0x68] sm:$0xff]
          %v202 = vld [vmem:[%s182 + $0x70] sm:$0xff]
          %v203 = vld [vmem:[%s182 + $0x78] sm:$0xff]
          %v204 = vld [vmem:[%s1] sm:$0xff]
          %v205 = vld [vmem:[%s1 + $0x8] sm:$0xff]
          %v206 = vld [vmem:[%s1 + $0x10] sm:$0xff]
          %v207 = vld [vmem:[%s1 + $0x18] sm:$0xff]
          %v208 = vld [vmem:[%s2] sm:$0x1]
          %v210 = vlaneseq
          %v211 = vshrl.u32 %v210, 7
          %v212 = vsub.s32 0, %v211
          %v213 = vrot.slane %v208, %v212
          %vm215 = vcmask 261120
          %v217 = vsel %vm215, %v188, 0
          %v220 = vsel %vm215, %v189, 0
          %v223 = vsel %vm215, %v190, 0
          %v226 = vsel %vm215, %v191, 0
          %v229 = vsel %vm215, %v192, 0
          %v232 = vsel %vm215, %v193, 0
          %v235 = vsel %vm215, %v194, 0
          %v238 = vsel %vm215, %v195, 0
          %v241 = vsel %vm215, %v196, 0
          %v244 = vsel %vm215, %v197, 0
          %v247 = vsel %vm215, %v198, 0
          %v250 = vsel %vm215, %v199, 0
          %v253 = vsel %vm215, %v200, 0
          %v256 = vsel %vm215, %v201, 0
          %v259 = vsel %vm215, %v202, 0
          %v262 = vsel %vm215, %v203, 0
          %264 = vmatprep.subr.mxu0 0.0
          %265 = vmatpush1.msra.mxu0 %v204
          %266 = vmatprep.subr.mxu0 0.0
          %267 = vmatpush1.msra.mxu0 %v205
          %268 = vmatprep.subr.mxu0 0.0
          %269 = vmatpush1.msra.mxu0 %v206
          %270 = vmatprep.subr.mxu0 0.0
          %271 = vmatpush1.msra.mxu0 %v207
          %272 = vmatprep.subr.mxu0 0.0
          %273 = vmatpush1.msra.mxu0 0.0
          %274 = vmatprep.subr.mxu0 0.0
          %275 = vmatpush1.msra.mxu0 0.0
          %276 = vmatprep.subr.mxu0 0.0
          %277 = vmatpush1.msra.mxu0 0.0
          %278 = vmatprep.subr.mxu0 0.0
          %279 = vmatpush1.msra.mxu0 0.0
          %280 = vmatprep.subr.mxu0 0.0
          %281 = vmatpush1.msra.mxu0 0.0
          %282 = vmatprep.subr.mxu0 0.0
          %283 = vmatpush1.msra.mxu0 0.0
          %284 = vmatprep.subr.mxu0 0.0
          %285 = vmatpush1.msra.mxu0 0.0
          %286 = vmatprep.subr.mxu0 0.0
          %287 = vmatpush1.msra.mxu0 0.0
          %288 = vmatprep.subr.mxu0 0.0
          %289 = vmatpush1.msra.mxu0 0.0
          %290 = vmatprep.subr.mxu0 0.0
          %291 = vmatpush1.msra.mxu0 0.0
          %292 = vmatprep.subr.mxu0 0.0
          %293 = vmatpush1.msra.mxu0 0.0
          %294 = vmatprep.subr.mxu0 0.0
          %295 = vmatpush1.msra.mxu0 0.0
          %296 = vmatprep.subr.mxu0 0.0
          %297 = vmatpush1.msra.mxu0 0.0
          %298 = vmatprep.subr.mxu0 0.0
          %299 = vmatpush1.msra.mxu0 0.0
          %300 = vmatprep.subr.mxu0 0.0
          %301 = vmatpush1.msra.mxu0 0.0
          %302 = vmatprep.subr.mxu0 0.0
          %303 = vmatpush1.msra.mxu0 0.0
          %304 = vmatprep.subr.mxu0 0.0
          %305 = vmatpush1.msra.mxu0 0.0
          %306 = vmatprep.subr.mxu0 0.0
          %307 = vmatpush1.msra.mxu0 0.0
          %308 = vmatprep.subr.mxu0 0.0
          %309 = vmatpush1.msra.mxu0 0.0
          %310 = vmatprep.subr.mxu0 0.0
          %311 = vmatpush1.msra.mxu0 0.0
          %312 = vmatprep.subr.mxu0 0.0
          %313 = vmatpush1.msra.mxu0 0.0
          %314 = vmatprep.subr.mxu0 0.0
          %315 = vmatpush1.msra.mxu0 0.0
          %316 = vmatprep.subr.mxu0 0.0
          %317 = vmatpush1.msra.mxu0 0.0
          %318 = vmatprep.subr.mxu0 0.0
          %319 = vmatpush1.msra.mxu0 0.0
          %320 = vmatprep.subr.mxu0 0.0
          %321 = vmatpush1.msra.mxu0 0.0
          %322 = vmatprep.subr.mxu0 0.0
          %323 = vmatpush1.msra.mxu0 0.0
          %324 = vmatprep.subr.mxu0 0.0
          %325 = vmatpush1.msra.mxu0 0.0
          %326 = vmatprep.subr.mxu0 0.0
          %327 = vmatpush1.msra.mxu0 0.0
          %328 = vmatprep.mubr.f32.mxu0 0.0
          %329 = vmatmul.mubr.f32.gmra.mrb[0].mxu0 %v217
          %v330 = vpop.f32.mrb[0].mxu0
          %v331 = vadd.f32 %v213, %v330
          %v332 = vpop.f32.mrb[0].mxu0
          %333 = vmatprep.mubr.f32.mxu0 0.0
          %334 = vmatmul.mubr.f32.gmra.mrb[0].mxu0 %v220
          %v335 = vpop.f32.mrb[0].mxu0
          %v336 = vadd.f32 %v213, %v335
          %v337 = vpop.f32.mrb[0].mxu0
          %338 = vmatprep.mubr.f32.mxu0 0.0
          %339 = vmatmul.mubr.f32.gmra.mrb[0].mxu0 %v223
          %v340 = vpop.f32.mrb[0].mxu0
          %v341 = vadd.f32 %v213, %v340
          %v342 = vpop.f32.mrb[0].mxu0
          %343 = vmatprep.mubr.f32.mxu0 0.0
          %344 = vmatmul.mubr.f32.gmra.mrb[0].mxu0 %v226
          %v345 = vpop.f32.mrb[0].mxu0
          %v346 = vadd.f32 %v213, %v345
          %v347 = vpop.f32.mrb[0].mxu0
          %348 = vmatprep.mubr.f32.mxu0 0.0
          %349 = vmatmul.mubr.f32.gmra.mrb[0].mxu0 %v229
          %v350 = vpop.f32.mrb[0].mxu0
          %v351 = vadd.f32 %v213, %v350
          %v352 = vpop.f32.mrb[0].mxu0
          %353 = vmatprep.mubr.f32.mxu0 0.0
          %354 = vmatmul.mubr.f32.gmra.mrb[0].mxu0 %v232
          %v355 = vpop.f32.mrb[0].mxu0
          %v356 = vadd.f32 %v213, %v355
          %v357 = vpop.f32.mrb[0].mxu0
          %358 = vmatprep.mubr.f32.mxu0 0.0
          %359 = vmatmul.mubr.f32.gmra.mrb[0].mxu0 %v235
          %v360 = vpop.f32.mrb[0].mxu0
          %v361 = vadd.f32 %v213, %v360
          %v362 = vpop.f32.mrb[0].mxu0
          %363 = vmatprep.mubr.f32.mxu0 0.0
          %364 = vmatmul.mubr.f32.gmra.mrb[0].mxu0 %v238
          %v365 = vpop.f32.mrb[0].mxu0
          %v366 = vadd.f32 %v213, %v365
          %v367 = vpop.f32.mrb[0].mxu0
          %368 = vmatprep.mubr.f32.mxu0 0.0
          %369 = vmatmul.mubr.f32.gmra.mrb[0].mxu0 %v241
          %v370 = vpop.f32.mrb[0].mxu0
          %v371 = vadd.f32 %v213, %v370
          %v372 = vpop.f32.mrb[0].mxu0
          %373 = vmatprep.mubr.f32.mxu0 0.0
          %374 = vmatmul.mubr.f32.gmra.mrb[0].mxu0 %v244
          %v375 = vpop.f32.mrb[0].mxu0
          %v376 = vadd.f32 %v213, %v375
          %v377 = vpop.f32.mrb[0].mxu0
          %378 = vmatprep.mubr.f32.mxu0 0.0
          %379 = vmatmul.mubr.f32.gmra.mrb[0].mxu0 %v247
          %v380 = vpop.f32.mrb[0].mxu0
          %v381 = vadd.f32 %v213, %v380
          %v382 = vpop.f32.mrb[0].mxu0
          %383 = vmatprep.mubr.f32.mxu0 0.0
          %384 = vmatmul.mubr.f32.gmra.mrb[0].mxu0 %v250
          %v385 = vpop.f32.mrb[0].mxu0
          %v386 = vadd.f32 %v213, %v385
          %v387 = vpop.f32.mrb[0].mxu0
          %388 = vmatprep.mubr.f32.mxu0 0.0
          %389 = vmatmul.mubr.f32.gmra.mrb[0].mxu0 %v253
          %v390 = vpop.f32.mrb[0].mxu0
          %v391 = vadd.f32 %v213, %v390
          %v392 = vpop.f32.mrb[0].mxu0
          %393 = vmatprep.mubr.f32.mxu0 0.0
          %394 = vmatmul.mubr.f32.gmra.mrb[0].mxu0 %v256
          %v395 = vpop.f32.mrb[0].mxu0
          %v396 = vadd.f32 %v213, %v395
          %v397 = vpop.f32.mrb[0].mxu0
          %398 = vmatprep.mubr.f32.mxu0 0.0
          %399 = vmatmul.mubr.f32.gmra.mrb[0].mxu0 %v259
          %v400 = vpop.f32.mrb[0].mxu0
          %v401 = vadd.f32 %v213, %v400
          %v402 = vpop.f32.mrb[0].mxu0
          %403 = vmatprep.mubr.f32.mxu0 0.0
          %404 = vmatmul.mubr.f32.gmra.mrb[0].mxu0 %v262
          %v405 = vpop.f32.mrb[0].mxu0
          %v406 = vadd.f32 %v213, %v405
          %v407 = vpop.f32.mrb[0].mxu0
          %408 = vdwg.mxu0
          %409 = vst.msk [vmem:[#allocation2] sm:$0xff] %vm215, %v331
          %410 = vst.msk [vmem:[#allocation2 + $0x8] sm:$0xff] %vm215, %v336
          %411 = vst.msk [vmem:[#allocation2 + $0x10] sm:$0xff] %vm215, %v341
          %412 = vst.msk [vmem:[#allocation2 + $0x18] sm:$0xff] %vm215, %v346
          %413 = vst.msk [vmem:[#allocation2 + $0x20] sm:$0xff] %vm215, %v351
          %414 = vst.msk [vmem:[#allocation2 + $0x28] sm:$0xff] %vm215, %v356
          %415 = vst.msk [vmem:[#allocation2 + $0x30] sm:$0xff] %vm215, %v361
          %416 = vst.msk [vmem:[#allocation2 + $0x38] sm:$0xff] %vm215, %v366
          %417 = vst.msk [vmem:[#allocation2 + $0x40] sm:$0xff] %vm215, %v371
          %418 = vst.msk [vmem:[#allocation2 + $0x48] sm:$0xff] %vm215, %v376
          %419 = vst.msk [vmem:[#allocation2 + $0x50] sm:$0xff] %vm215, %v381
          %420 = vst.msk [vmem:[#allocation2 + $0x58] sm:$0xff] %vm215, %v386
          %421 = vst.msk [vmem:[#allocation2 + $0x60] sm:$0xff] %vm215, %v391
          %422 = vst.msk [vmem:[#allocation2 + $0x68] sm:$0xff] %vm215, %v396
          %423 = vst.msk [vmem:[#allocation2 + $0x70] sm:$0xff] %vm215, %v401
          %424 = vst.msk [vmem:[#allocation2 + $0x78] sm:$0xff] %vm215, %v406
        $region36: #{tpu_custom_call.1} parent=31 // pred_fallthru
          _
        %s425 = smul.u32 %s22, 128
        %s426 = scalar_lea.vmem [#allocation2], %s425
        %v427 = vld [vmem:[%s426] sm:$0xff]
        %v428 = vld [vmem:[%s426 + $0x8] sm:$0xff]
        %v429 = vld [vmem:[%s426 + $0x10] sm:$0xff]
        %v430 = vld [vmem:[%s426 + $0x18] sm:$0xff]
        %v431 = vld [vmem:[%s426 + $0x20] sm:$0xff]
        %v432 = vld [vmem:[%s426 + $0x28] sm:$0xff]
        %v433 = vld [vmem:[%s426 + $0x30] sm:$0xff]
        %v434 = vld [vmem:[%s426 + $0x38] sm:$0xff]
        %v435 = vld [vmem:[%s426 + $0x40] sm:$0xff]
        %v436 = vld [vmem:[%s426 + $0x48] sm:$0xff]
        %v437 = vld [vmem:[%s426 + $0x50] sm:$0xff]
        %v438 = vld [vmem:[%s426 + $0x58] sm:$0xff]
        %v439 = vld [vmem:[%s426 + $0x60] sm:$0xff]
        %v440 = vld [vmem:[%s426 + $0x68] sm:$0xff]
        %v441 = vld [vmem:[%s426 + $0x70] sm:$0xff]
        %v442 = vld [vmem:[%s426 + $0x78] sm:$0xff]
        %v443 = vld [vmem:[#allocation2] sm:$0xff]
        %v444 = vld [vmem:[#allocation2 + $0x8] sm:$0xff]
        %v445 = vld [vmem:[#allocation2 + $0x10] sm:$0xff]
        %v446 = vld [vmem:[#allocation2 + $0x18] sm:$0xff]
        %v447 = vld [vmem:[#allocation2 + $0x20] sm:$0xff]
        %v448 = vld [vmem:[#allocation2 + $0x28] sm:$0xff]
        %v449 = vld [vmem:[#allocation2 + $0x30] sm:$0xff]
        %v450 = vld [vmem:[#allocation2 + $0x38] sm:$0xff]
        %v451 = vld [vmem:[#allocation2 + $0x40] sm:$0xff]
        %v452 = vld [vmem:[#allocation2 + $0x48] sm:$0xff]
        %v453 = vld [vmem:[#allocation2 + $0x50] sm:$0xff]
        %v454 = vld [vmem:[#allocation2 + $0x58] sm:$0xff]
        %v455 = vld [vmem:[#allocation2 + $0x60] sm:$0xff]
        %v456 = vld [vmem:[#allocation2 + $0x68] sm:$0xff]
        %v457 = vld [vmem:[#allocation2 + $0x70] sm:$0xff]
        %v458 = vld [vmem:[#allocation2 + $0x78] sm:$0xff]
        %vm459 = vcmask 261120
        %v461 = vsel %vm459, %v427, 0
        %v464 = vsel %vm459, %v428, 0
        %v467 = vsel %vm459, %v429, 0
        %v470 = vsel %vm459, %v430, 0
        %v473 = vsel %vm459, %v431, 0
        %v476 = vsel %vm459, %v432, 0
        %v479 = vsel %vm459, %v433, 0
        %v482 = vsel %vm459, %v434, 0
        %v485 = vsel %vm459, %v435, 0
        %v488 = vsel %vm459, %v436, 0
        %v491 = vsel %vm459, %v437, 0
        %v494 = vsel %vm459, %v438, 0
        %v497 = vsel %vm459, %v439, 0
        %v500 = vsel %vm459, %v440, 0
        %v503 = vsel %vm459, %v441, 0
        %v506 = vsel %vm459, %v442, 0
        %v509 = vsel %vm459, %v443, 0
        %v512 = vsel %vm459, %v444, 0
        %v515 = vsel %vm459, %v445, 0
        %v518 = vsel %vm459, %v446, 0
        %v521 = vsel %vm459, %v447, 0
        %v524 = vsel %vm459, %v448, 0
        %v527 = vsel %vm459, %v449, 0
        %v530 = vsel %vm459, %v450, 0
        %v533 = vsel %vm459, %v451, 0
        %v536 = vsel %vm459, %v452, 0
        %v539 = vsel %vm459, %v453, 0
        %v542 = vsel %vm459, %v454, 0
        %v545 = vsel %vm459, %v455, 0
        %v548 = vsel %vm459, %v456, 0
        %v551 = vsel %vm459, %v457, 0
        %v554 = vsel %vm459, %v458, 0
        %556 = vmatprep.subr.mxu0 0.0
        %557 = vmatpush1.xpose.msra.mxu0 %v509
        %558 = vmatprep.subr.mxu0 0.0
        %559 = vmatpush1.xpose.msra.mxu0 %v512
        %560 = vmatprep.subr.mxu0 0.0
        %561 = vmatpush1.xpose.msra.mxu0 %v515
        %562 = vmatprep.subr.mxu0 0.0
        %563 = vmatpush1.xpose.msra.mxu0 %v518
        %564 = vmatprep.subr.mxu0 0.0
        %565 = vmatpush1.xpose.msra.mxu0 %v521
        %566 = vmatprep.subr.mxu0 0.0
        %567 = vmatpush1.xpose.msra.mxu0 %v524
        %568 = vmatprep.subr.mxu0 0.0
        %569 = vmatpush1.xpose.msra.mxu0 %v527
        %570 = vmatprep.subr.mxu0 0.0
        %571 = vmatpush1.xpose.msra.mxu0 %v530
        %572 = vmatprep.subr.mxu0 0.0
        %573 = vmatpush1.xpose.msra.mxu0 %v533
        %574 = vmatprep.subr.mxu0 0.0
        %575 = vmatpush1.xpose.msra.mxu0 %v536
        %576 = vmatprep.subr.mxu0 0.0
        %577 = vmatpush1.xpose.msra.mxu0 %v539
        %578 = vmatprep.subr.mxu0 0.0
        %579 = vmatpush1.xpose.msra.mxu0 %v542
        %580 = vmatprep.subr.mxu0 0.0
        %581 = vmatpush1.xpose.msra.mxu0 %v545
        %582 = vmatprep.subr.mxu0 0.0
        %583 = vmatpush1.xpose.msra.mxu0 %v548
        %584 = vmatprep.subr.mxu0 0.0
        %585 = vmatpush1.xpose.msra.mxu0 %v551
        %586 = vmatprep.subr.mxu0 0.0
        %587 = vmatpush1.xpose.msra.mxu0 %v554
        %588 = vmatprep.subr.mxu0 0.0
        %589 = vmatpush1.xpose.msra.mxu0 0.0
        %590 = vmatprep.subr.mxu0 0.0
        %591 = vmatpush1.xpose.msra.mxu0 0.0
        %592 = vmatprep.subr.mxu0 0.0
        %593 = vmatpush1.xpose.msra.mxu0 0.0
        %594 = vmatprep.subr.mxu0 0.0
        %595 = vmatpush1.xpose.msra.mxu0 0.0
        %596 = vmatprep.subr.mxu0 0.0
        %597 = vmatpush1.xpose.msra.mxu0 0.0
        %598 = vmatprep.subr.mxu0 0.0
        %599 = vmatpush1.xpose.msra.mxu0 0.0
        %600 = vmatprep.subr.mxu0 0.0
        %601 = vmatpush1.xpose.msra.mxu0 0.0
        %602 = vmatprep.subr.mxu0 0.0
        %603 = vmatpush1.xpose.msra.mxu0 0.0
        %604 = vmatprep.subr.mxu0 0.0
        %605 = vmatpush1.xpose.msra.mxu0 0.0
        %606 = vmatprep.subr.mxu0 0.0
        %607 = vmatpush1.xpose.msra.mxu0 0.0
        %608 = vmatprep.subr.mxu0 0.0
        %609 = vmatpush1.xpose.msra.mxu0 0.0
        %610 = vmatprep.subr.mxu0 0.0
        %611 = vmatpush1.xpose.msra.mxu0 0.0
        %612 = vmatprep.subr.mxu0 0.0
        %613 = vmatpush1.xpose.msra.mxu0 0.0
        %614 = vmatprep.subr.mxu0 0.0
        %615 = vmatpush1.xpose.msra.mxu0 0.0
        %616 = vmatprep.subr.mxu0 0.0
        %617 = vmatpush1.xpose.msra.mxu0 0.0
        %618 = vmatprep.subr.mxu0 0.0
        %619 = vmatpush1.xpose.msra.mxu0 0.0
        %620 = vmatprep.mubr.f32.mxu0 0.0
        %621 = vmatmul.mubr.f32.gmra.mrb[0].mxu0 %v461
        %v622 = vpop.f32.mrb[0].mxu0
        %v623 = vadd.f32 0.0, %v622
        %v624 = vpop.f32.mrb[0].mxu0
        %625 = vmatprep.mubr.f32.mxu0 0.0
        %626 = vmatmul.mubr.f32.gmra.mrb[0].mxu0 %v464
        %v627 = vpop.f32.mrb[0].mxu0
        %v628 = vadd.f32 0.0, %v627
        %v629 = vpop.f32.mrb[0].mxu0
        %630 = vmatprep.mubr.f32.mxu0 0.0
        %631 = vmatmul.mubr.f32.gmra.mrb[0].mxu0 %v467
        %v632 = vpop.f32.mrb[0].mxu0
        %v633 = vadd.f32 0.0, %v632
        %v634 = vpop.f32.mrb[0].mxu0
        %635 = vmatprep.mubr.f32.mxu0 0.0
        %636 = vmatmul.mubr.f32.gmra.mrb[0].mxu0 %v470
        %v637 = vpop.f32.mrb[0].mxu0
        %v638 = vadd.f32 0.0, %v637
        %v639 = vpop.f32.mrb[0].mxu0
        %640 = vmatprep.mubr.f32.mxu0 0.0
        %641 = vmatmul.mubr.f32.gmra.mrb[0].mxu0 %v473
        %v642 = vpop.f32.mrb[0].mxu0
        %v643 = vadd.f32 0.0, %v642
        %v644 = vpop.f32.mrb[0].mxu0
        %645 = vmatprep.mubr.f32.mxu0 0.0
        %646 = vmatmul.mubr.f32.gmra.mrb[0].mxu0 %v476
        %v647 = vpop.f32.mrb[0].mxu0
        %v648 = vadd.f32 0.0, %v647
        %v649 = vpop.f32.mrb[0].mxu0
        %650 = vmatprep.mubr.f32.mxu0 0.0
        %651 = vmatmul.mubr.f32.gmra.mrb[0].mxu0 %v479
        %v652 = vpop.f32.mrb[0].mxu0
        %v653 = vadd.f32 0.0, %v652
        %v654 = vpop.f32.mrb[0].mxu0
        %655 = vmatprep.mubr.f32.mxu0 0.0
        %656 = vmatmul.mubr.f32.gmra.mrb[0].mxu0 %v482
        %v657 = vpop.f32.mrb[0].mxu0
        %v658 = vadd.f32 0.0, %v657
        %v659 = vpop.f32.mrb[0].mxu0
        %660 = vmatprep.mubr.f32.mxu0 0.0
        %661 = vmatmul.mubr.f32.gmra.mrb[0].mxu0 %v485
        %v662 = vpop.f32.mrb[0].mxu0
        %v663 = vadd.f32 0.0, %v662
        %v664 = vpop.f32.mrb[0].mxu0
        %665 = vmatprep.mubr.f32.mxu0 0.0
        %666 = vmatmul.mubr.f32.gmra.mrb[0].mxu0 %v488
        %v667 = vpop.f32.mrb[0].mxu0
        %v668 = vadd.f32 0.0, %v667
        %v669 = vpop.f32.mrb[0].mxu0
        %670 = vmatprep.mubr.f32.mxu0 0.0
        %671 = vmatmul.mubr.f32.gmra.mrb[0].mxu0 %v491
        %v672 = vpop.f32.mrb[0].mxu0
        %v673 = vadd.f32 0.0, %v672
        %v674 = vpop.f32.mrb[0].mxu0
        %675 = vmatprep.mubr.f32.mxu0 0.0
        %676 = vmatmul.mubr.f32.gmra.mrb[0].mxu0 %v494
        %v677 = vpop.f32.mrb[0].mxu0
        %v678 = vadd.f32 0.0, %v677
        %v679 = vpop.f32.mrb[0].mxu0
        %680 = vmatprep.mubr.f32.mxu0 0.0
        %681 = vmatmul.mubr.f32.gmra.mrb[0].mxu0 %v497
        %v682 = vpop.f32.mrb[0].mxu0
        %v683 = vadd.f32 0.0, %v682
        %v684 = vpop.f32.mrb[0].mxu0
        %685 = vmatprep.mubr.f32.mxu0 0.0
        %686 = vmatmul.mubr.f32.gmra.mrb[0].mxu0 %v500
        %v687 = vpop.f32.mrb[0].mxu0
        %v688 = vadd.f32 0.0, %v687
        %v689 = vpop.f32.mrb[0].mxu0
        %690 = vmatprep.mubr.f32.mxu0 0.0
        %691 = vmatmul.mubr.f32.gmra.mrb[0].mxu0 %v503
        %v692 = vpop.f32.mrb[0].mxu0
        %v693 = vadd.f32 0.0, %v692
        %v694 = vpop.f32.mrb[0].mxu0
        %695 = vmatprep.mubr.f32.mxu0 0.0
        %696 = vmatmul.mubr.f32.gmra.mrb[0].mxu0 %v506
        %v697 = vpop.f32.mrb[0].mxu0
        %v698 = vadd.f32 0.0, %v697
        %v699 = vpop.f32.mrb[0].mxu0
        %700 = vdwg.mxu0
        %v701 = vlaneseq
        %v702 = vshrl.u32 %v701, 7
        %v703 = vadd.s32 %v702, 8
        %v704 = vadd.s32 %v702, 16
        %v705 = vadd.s32 %v702, 24
        %v706 = vadd.s32 %v702, 32
        %v707 = vadd.s32 %v702, 40
        %v708 = vadd.s32 %v702, 48
        %v709 = vadd.s32 %v702, 56
        %v710 = vadd.s32 %v702, 64
        %v711 = vadd.s32 %v702, 72
        %v712 = vadd.s32 %v702, 80
        %v713 = vadd.s32 %v702, 88
        %v714 = vadd.s32 %v702, 96
        %v715 = vadd.s32 %v702, 104
        %v716 = vadd.s32 %v702, 112
        %v717 = vadd.s32 %v702, 120
        %v718 = vstv %s425
        %v719 = vadd.s32 %v702, %v718
        %v720 = vadd.s32 %v703, %v718
        %v721 = vadd.s32 %v704, %v718
        %v722 = vadd.s32 %v705, %v718
        %v723 = vadd.s32 %v706, %v718
        %v724 = vadd.s32 %v707, %v718
        %v725 = vadd.s32 %v708, %v718
        %v726 = vadd.s32 %v709, %v718
        %v727 = vadd.s32 %v710, %v718
        %v728 = vadd.s32 %v711, %v718
        %v729 = vadd.s32 %v712, %v718
        %v730 = vadd.s32 %v713, %v718
        %v731 = vadd.s32 %v714, %v718
        %v732 = vadd.s32 %v715, %v718
        %v733 = vadd.s32 %v716, %v718
        %v734 = vadd.s32 %v717, %v718
        %v735 = vlaneseq
        %v736 = vand.u32 %v735, 127
        %vm737 = vcmp.eq.s32.totalorder %v719, %v736
        %vm738 = vcmp.eq.s32.totalorder %v720, %v736
        %vm739 = vcmp.eq.s32.totalorder %v721, %v736
        %vm740 = vcmp.eq.s32.totalorder %v722, %v736
        %vm741 = vcmp.eq.s32.totalorder %v723, %v736
        %vm742 = vcmp.eq.s32.totalorder %v724, %v736
        %vm743 = vcmp.eq.s32.totalorder %v725, %v736
        %vm744 = vcmp.eq.s32.totalorder %v726, %v736
        %vm745 = vcmp.eq.s32.totalorder %v727, %v736
        %vm746 = vcmp.eq.s32.totalorder %v728, %v736
        %vm747 = vcmp.eq.s32.totalorder %v729, %v736
        %vm748 = vcmp.eq.s32.totalorder %v730, %v736
        %vm749 = vcmp.eq.s32.totalorder %v731, %v736
        %vm750 = vcmp.eq.s32.totalorder %v732, %v736
        %vm751 = vcmp.eq.s32.totalorder %v733, %v736
        %vm752 = vcmp.eq.s32.totalorder %v734, %v736
        %v753 = vsub.f32 %v623, 1e+08
        %v754 = vsub.f32 %v628, 1e+08
        %v755 = vsub.f32 %v633, 1e+08
        %v756 = vsub.f32 %v638, 1e+08
        %v757 = vsub.f32 %v643, 1e+08
        %v758 = vsub.f32 %v648, 1e+08
        %v759 = vsub.f32 %v653, 1e+08
        %v760 = vsub.f32 %v658, 1e+08
        %v761 = vsub.f32 %v663, 1e+08
        %v762 = vsub.f32 %v668, 1e+08
        %v763 = vsub.f32 %v673, 1e+08
        %v764 = vsub.f32 %v678, 1e+08
        %v765 = vsub.f32 %v683, 1e+08
        %v766 = vsub.f32 %v688, 1e+08
        %v767 = vsub.f32 %v693, 1e+08
        %v768 = vsub.f32 %v698, 1e+08
        %v769 = vsel %vm737, %v753, %v623
        %v770 = vsel %vm738, %v754, %v628
        %v771 = vsel %vm739, %v755, %v633
        %v772 = vsel %vm740, %v756, %v638
        %v773 = vsel %vm741, %v757, %v643
        %v774 = vsel %vm742, %v758, %v648
        %v775 = vsel %vm743, %v759, %v653
        %v776 = vsel %vm744, %v760, %v658
        %v777 = vsel %vm745, %v761, %v663
        %v778 = vsel %vm746, %v762, %v668
        %v779 = vsel %vm747, %v763, %v673
        %v780 = vsel %vm748, %v764, %v678
        %v781 = vsel %vm749, %v765, %v683
        %v782 = vsel %vm750, %v766, %v688
        %v783 = vsel %vm751, %v767, %v693
        %v784 = vsel %vm752, %v768, %v698
        %vm785 = vcmp.ge.f32.partialorder %v769, 0.0
        %vm786 = vcmp.ge.f32.partialorder %v770, 0.0
        %vm787 = vcmp.ge.f32.partialorder %v771, 0.0
        %vm788 = vcmp.ge.f32.partialorder %v772, 0.0
        %vm789 = vcmp.ge.f32.partialorder %v773, 0.0
        %vm790 = vcmp.ge.f32.partialorder %v774, 0.0
        %vm791 = vcmp.ge.f32.partialorder %v775, 0.0
        %vm792 = vcmp.ge.f32.partialorder %v776, 0.0
        %vm793 = vcmp.ge.f32.partialorder %v777, 0.0
        %vm794 = vcmp.ge.f32.partialorder %v778, 0.0
        %vm795 = vcmp.ge.f32.partialorder %v779, 0.0
        %vm796 = vcmp.ge.f32.partialorder %v780, 0.0
        %vm797 = vcmp.ge.f32.partialorder %v781, 0.0
        %vm798 = vcmp.ge.f32.partialorder %v782, 0.0
        %vm799 = vcmp.ge.f32.partialorder %v783, 0.0
        %vm800 = vcmp.ge.f32.partialorder %v784, 0.0
        %v801 = vmul.f32 %v769, 0.01
        %v802 = vmul.f32 %v770, 0.01
        %v803 = vmul.f32 %v771, 0.01
        %v804 = vmul.f32 %v772, 0.01
        %v805 = vmul.f32 %v773, 0.01
        %v806 = vmul.f32 %v774, 0.01
        %v807 = vmul.f32 %v775, 0.01
        %v808 = vmul.f32 %v776, 0.01
        %v809 = vmul.f32 %v777, 0.01
        %v810 = vmul.f32 %v778, 0.01
        %v811 = vmul.f32 %v779, 0.01
        %v812 = vmul.f32 %v780, 0.01
        %v813 = vmul.f32 %v781, 0.01
        %v814 = vmul.f32 %v782, 0.01
        %v815 = vmul.f32 %v783, 0.01
        %v816 = vmul.f32 %v784, 0.01
        %v817 = vsel %vm785, %v769, %v801
        %v818 = vsel %vm786, %v770, %v802
        %v819 = vsel %vm787, %v771, %v803
        %v820 = vsel %vm788, %v772, %v804
        %v821 = vsel %vm789, %v773, %v805
        %v822 = vsel %vm790, %v774, %v806
        %v823 = vsel %vm791, %v775, %v807
        %v824 = vsel %vm792, %v776, %v808
        %v825 = vsel %vm793, %v777, %v809
        %v826 = vsel %vm794, %v778, %v810
        %v827 = vsel %vm795, %v779, %v811
        %v828 = vsel %vm796, %v780, %v812
        %v829 = vsel %vm797, %v781, %v813
        %v830 = vsel %vm798, %v782, %v814
        %v831 = vsel %vm799, %v783, %v815
        %v832 = vsel %vm800, %v784, %v816
        %vm833 = vcmp.lt.s32.totalorder %v736, 8
        %v834 = vsel %vm833, %v817, -1e+30
        %v835 = vsel %vm833, %v818, -1e+30
        %v836 = vsel %vm833, %v819, -1e+30
        %v837 = vsel %vm833, %v820, -1e+30
        %v838 = vsel %vm833, %v821, -1e+30
        %v839 = vsel %vm833, %v822, -1e+30
        %v840 = vsel %vm833, %v823, -1e+30
        %v841 = vsel %vm833, %v824, -1e+30
        %v842 = vsel %vm833, %v825, -1e+30
        %v843 = vsel %vm833, %v826, -1e+30
        %v844 = vsel %vm833, %v827, -1e+30
        %v845 = vsel %vm833, %v828, -1e+30
        %v846 = vsel %vm833, %v829, -1e+30
        %v847 = vsel %vm833, %v830, -1e+30
        %v848 = vsel %vm833, %v831, -1e+30
        %v849 = vsel %vm833, %v832, -1e+30
        %850 = vmax.xlane.f32.xlu0 %v834
        %v851 = vpop.xlane.xlu0 %850
        %852 = vmax.xlane.f32.xlu0 %v835
        %v853 = vpop.xlane.xlu0 %852
        %854 = vmax.xlane.f32.xlu0 %v836
        %v855 = vpop.xlane.xlu0 %854
        %856 = vmax.xlane.f32.xlu0 %v837
        %v857 = vpop.xlane.xlu0 %856
        %858 = vmax.xlane.f32.xlu0 %v838
        %v859 = vpop.xlane.xlu0 %858
        %860 = vmax.xlane.f32.xlu0 %v839
        %v861 = vpop.xlane.xlu0 %860
        %862 = vmax.xlane.f32.xlu0 %v840
        %v863 = vpop.xlane.xlu0 %862
        %864 = vmax.xlane.f32.xlu0 %v841
        %v865 = vpop.xlane.xlu0 %864
        %866 = vmax.xlane.f32.xlu0 %v842
        %v867 = vpop.xlane.xlu0 %866
        %868 = vmax.xlane.f32.xlu0 %v843
        %v869 = vpop.xlane.xlu0 %868
        %870 = vmax.xlane.f32.xlu0 %v844
        %v871 = vpop.xlane.xlu0 %870
        %872 = vmax.xlane.f32.xlu0 %v845
        %v873 = vpop.xlane.xlu0 %872
        %874 = vmax.xlane.f32.xlu0 %v846
        %v875 = vpop.xlane.xlu0 %874
        %876 = vmax.xlane.f32.xlu0 %v847
        %v877 = vpop.xlane.xlu0 %876
        %878 = vmax.xlane.f32.xlu0 %v848
        %v879 = vpop.xlane.xlu0 %878
        %880 = vmax.xlane.f32.xlu0 %v849
        %v881 = vpop.xlane.xlu0 %880
        %v882 = vsub.f32 %v834, %v851
        %v883 = vsub.f32 %v835, %v853
        %v884 = vsub.f32 %v836, %v855
        %v885 = vsub.f32 %v837, %v857
        %v886 = vsub.f32 %v838, %v859
        %v887 = vsub.f32 %v839, %v861
        %v888 = vsub.f32 %v840, %v863
        %v889 = vsub.f32 %v841, %v865
        %v890 = vsub.f32 %v842, %v867
        %v891 = vsub.f32 %v843, %v869
        %v892 = vsub.f32 %v844, %v871
        %v893 = vsub.f32 %v845, %v873
        %v894 = vsub.f32 %v846, %v875
        %v895 = vsub.f32 %v847, %v877
        %v896 = vsub.f32 %v848, %v879
        %v897 = vsub.f32 %v849, %v881
        %v898 = vmul.f32 %v882, 1.442695
        %v899 = vpow.pop %v898
        %v900 = vmul.f32 %v883, 1.442695
        %v901 = vpow.pop %v900
        %v902 = vmul.f32 %v884, 1.442695
        %v903 = vpow.pop %v902
        %v904 = vmul.f32 %v885, 1.442695
        %v905 = vpow.pop %v904
        %v906 = vmul.f32 %v886, 1.442695
        %v907 = vpow.pop %v906
        %v908 = vmul.f32 %v887, 1.442695
        %v909 = vpow.pop %v908
        %v910 = vmul.f32 %v888, 1.442695
        %v911 = vpow.pop %v910
        %v912 = vmul.f32 %v889, 1.442695
        %v913 = vpow.pop %v912
        %v914 = vmul.f32 %v890, 1.442695
        %v915 = vpow.pop %v914
        %v916 = vmul.f32 %v891, 1.442695
        %v917 = vpow.pop %v916
        %v918 = vmul.f32 %v892, 1.442695
        %v919 = vpow.pop %v918
        %v920 = vmul.f32 %v893, 1.442695
        %v921 = vpow.pop %v920
        %v922 = vmul.f32 %v894, 1.442695
        %v923 = vpow.pop %v922
        %v924 = vmul.f32 %v895, 1.442695
        %v925 = vpow.pop %v924
        %v926 = vmul.f32 %v896, 1.442695
        %v927 = vpow.pop %v926
        %v928 = vmul.f32 %v897, 1.442695
        %v929 = vpow.pop %v928
        %930 = vadd.xlane.f32.xlu0 %v899
        %v931 = vpop.xlane.xlu0 %930
        %932 = vadd.xlane.f32.xlu0 %v901
        %v933 = vpop.xlane.xlu0 %932
        %934 = vadd.xlane.f32.xlu0 %v903
        %v935 = vpop.xlane.xlu0 %934
        %936 = vadd.xlane.f32.xlu0 %v905
        %v937 = vpop.xlane.xlu0 %936
        %938 = vadd.xlane.f32.xlu0 %v907
        %v939 = vpop.xlane.xlu0 %938
        %940 = vadd.xlane.f32.xlu0 %v909
        %v941 = vpop.xlane.xlu0 %940
        %942 = vadd.xlane.f32.xlu0 %v911
        %v943 = vpop.xlane.xlu0 %942
        %944 = vadd.xlane.f32.xlu0 %v913
        %v945 = vpop.xlane.xlu0 %944
        %946 = vadd.xlane.f32.xlu0 %v915
        %v947 = vpop.xlane.xlu0 %946
        %948 = vadd.xlane.f32.xlu0 %v917
        %v949 = vpop.xlane.xlu0 %948
        %950 = vadd.xlane.f32.xlu0 %v919
        %v951 = vpop.xlane.xlu0 %950
        %952 = vadd.xlane.f32.xlu0 %v921
        %v953 = vpop.xlane.xlu0 %952
        %954 = vadd.xlane.f32.xlu0 %v923
        %v955 = vpop.xlane.xlu0 %954
        %956 = vadd.xlane.f32.xlu0 %v925
        %v957 = vpop.xlane.xlu0 %956
        %958 = vadd.xlane.f32.xlu0 %v927
        %v959 = vpop.xlane.xlu0 %958
        %960 = vadd.xlane.f32.xlu0 %v929
        %v961 = vpop.xlane.xlu0 %960
        %v962 = vrcp.pop %v931
        %v963 = vmul.f32 1.0, %v962
        %v964 = vrcp.pop %v933
        %v965 = vmul.f32 1.0, %v964
        %v966 = vrcp.pop %v935
        %v967 = vmul.f32 1.0, %v966
        %v968 = vrcp.pop %v937
        %v969 = vmul.f32 1.0, %v968
        %v970 = vrcp.pop %v939
        %v971 = vmul.f32 1.0, %v970
        %v972 = vrcp.pop %v941
        %v973 = vmul.f32 1.0, %v972
        %v974 = vrcp.pop %v943
        %v975 = vmul.f32 1.0, %v974
        %v976 = vrcp.pop %v945
        %v977 = vmul.f32 1.0, %v976
        %v978 = vrcp.pop %v947
        %v979 = vmul.f32 1.0, %v978
        %v980 = vrcp.pop %v949
        %v981 = vmul.f32 1.0, %v980
        %v982 = vrcp.pop %v951
        %v983 = vmul.f32 1.0, %v982
        %v984 = vrcp.pop %v953
        %v985 = vmul.f32 1.0, %v984
        %v986 = vrcp.pop %v955
        %v987 = vmul.f32 1.0, %v986
        %v988 = vrcp.pop %v957
        %v989 = vmul.f32 1.0, %v988
        %v990 = vrcp.pop %v959
        %v991 = vmul.f32 1.0, %v990
        %v992 = vrcp.pop %v961
        %v993 = vmul.f32 1.0, %v992
        %v994 = vmul.f32 %v899, %v963
        %v995 = vmul.f32 %v901, %v965
        %v996 = vmul.f32 %v903, %v967
        %v997 = vmul.f32 %v905, %v969
        %v998 = vmul.f32 %v907, %v971
        %v999 = vmul.f32 %v909, %v973
        %v1000 = vmul.f32 %v911, %v975
        %v1001 = vmul.f32 %v913, %v977
        %v1002 = vmul.f32 %v915, %v979
        %v1003 = vmul.f32 %v917, %v981
        %v1004 = vmul.f32 %v919, %v983
        %v1005 = vmul.f32 %v921, %v985
        %v1006 = vmul.f32 %v923, %v987
        %v1007 = vmul.f32 %v925, %v989
        %v1008 = vmul.f32 %v927, %v991
        %v1009 = vmul.f32 %v929, %v993
        %v1010 = vadd.f32 %v994, 1.0
        %v1011 = vadd.f32 %v995, 1.0
        %v1012 = vadd.f32 %v996, 1.0
        %v1013 = vadd.f32 %v997, 1.0
        %v1014 = vadd.f32 %v998, 1.0
        %v1015 = vadd.f32 %v999, 1.0
        %v1016 = vadd.f32 %v1000, 1.0
        %v1017 = vadd.f32 %v1001, 1.0
        %v1018 = vadd.f32 %v1002, 1.0
        %v1019 = vadd.f32 %v1003, 1.0
        %v1020 = vadd.f32 %v1004, 1.0
        %v1021 = vadd.f32 %v1005, 1.0
        %v1022 = vadd.f32 %v1006, 1.0
        %v1023 = vadd.f32 %v1007, 1.0
        %v1024 = vadd.f32 %v1008, 1.0
        %v1025 = vadd.f32 %v1009, 1.0
        %v1026 = vsel %vm737, %v1010, %v994
        %v1027 = vsel %vm738, %v1011, %v995
        %v1028 = vsel %vm739, %v1012, %v996
        %v1029 = vsel %vm740, %v1013, %v997
        %v1030 = vsel %vm741, %v1014, %v998
        %v1031 = vsel %vm742, %v1015, %v999
        %v1032 = vsel %vm743, %v1016, %v1000
        %v1033 = vsel %vm744, %v1017, %v1001
        %v1034 = vsel %vm745, %v1018, %v1002
        %v1035 = vsel %vm746, %v1019, %v1003
        %v1036 = vsel %vm747, %v1020, %v1004
        %v1037 = vsel %vm748, %v1021, %v1005
        %v1038 = vsel %vm749, %v1022, %v1006
        %v1039 = vsel %vm750, %v1023, %v1007
        %v1040 = vsel %vm751, %v1024, %v1008
        %v1041 = vsel %vm752, %v1025, %v1009
        %1042 = vst [vmem:[%s177] sm:$0xff] %v1026
        %1043 = vst [vmem:[%s177 + $0x8] sm:$0xff] %v1027
        %1044 = vst [vmem:[%s177 + $0x10] sm:$0xff] %v1028
        %1045 = vst [vmem:[%s177 + $0x18] sm:$0xff] %v1029
        %1046 = vst [vmem:[%s177 + $0x20] sm:$0xff] %v1030
        %1047 = vst [vmem:[%s177 + $0x28] sm:$0xff] %v1031
        %1048 = vst [vmem:[%s177 + $0x30] sm:$0xff] %v1032
        %1049 = vst [vmem:[%s177 + $0x38] sm:$0xff] %v1033
        %1050 = vst [vmem:[%s177 + $0x40] sm:$0xff] %v1034
        %1051 = vst [vmem:[%s177 + $0x48] sm:$0xff] %v1035
        %1052 = vst [vmem:[%s177 + $0x50] sm:$0xff] %v1036
        %1053 = vst [vmem:[%s177 + $0x58] sm:$0xff] %v1037
        %1054 = vst [vmem:[%s177 + $0x60] sm:$0xff] %v1038
        %1055 = vst [vmem:[%s177 + $0x68] sm:$0xff] %v1039
        %1056 = vst [vmem:[%s177 + $0x70] sm:$0xff] %v1040
        %1057 = vst [vmem:[%s177 + $0x78] sm:$0xff] %v1041
        %s1058 = sand.u32 %s107, 1
        %s1059 = scalar_lea.sflag [#allocation4], %s1058
        %s1060 = sand.u32 %s107, 1
        %s1061 = smul.addr %s1060, 128
        %s1062 = scalar_lea.vmem [#allocation3], %s1061
        // Predicated region
        $region37: #{tpu_custom_call.1} parent=31 // pred_check
          %p1063 = pneg %p117
        $region38: #{tpu_custom_call.1} parent=31 // pred_check_branch
          %1065 = sbr.rel (%p1063) target = $region40
        $region39: #{tpu_custom_call.1} parent=31 // pred_region
          %s1066 = smul.u32 16, %s22
          %s1068 = ssub.s32 2048, 2048
          %1069 = vsyncadd %s1059, %s1068
          %s1070 = smul.addr %s21, 16
          %s1071 = sadd.s32 %s1066, %s1070
          %s1072 = smul.addr %s1071, 128
          %s1073 = scalar_lea.hbm %s3, %s1072
          %s1074 = sshll.u32 %s1062, 4
          %s1075 = int_to_ptr.vmem [resolvable:$true] %s1074
          %1080 = dma.vmem_to_hbm [thread:$0]  %s1075, 2048, %s1073, %s1059, 128, 128, 8
        $region40: #{tpu_custom_call.1} parent=31 // pred_fallthru
          _
      $region32: #{tpu_custom_call.1} parent=5 // pred_fallthru
        _
      %p1081 = scmp.le.s32.totalorder 2, %s12
      // Predicated region
      $region41: #{tpu_custom_call.1} parent=5 // pred_check
        %p1082 = pneg %p1081
      $region42: #{tpu_custom_call.1} parent=5 // pred_check_branch
        %1084 = sbr.rel (%p1082) target = $region44
      $region43: #{tpu_custom_call.1} parent=5 // pred_region
        %s1085 = ssub.s32 %s12, 2
        // Predicated region
        $region45: #{tpu_custom_call.1} parent=43 // pred_check
          %p1086 = pneg %p123
        $region46: #{tpu_custom_call.1} parent=43 // pred_check_branch
          %1088 = sbr.rel (%p1086) target = $region48
        $region47: #{tpu_custom_call.1} parent=43 // pred_region
          %s1089 = sand.u32 %s108, 1
          %s1090 = scalar_lea.sflag [#allocation4], %s1089
          %s1091 = sand.u32 %s108, 1
          %s1092 = smul.addr %s1091, 128
          %s1093 = scalar_lea.vmem [#allocation3], %s1092
          %1094 = dma.done %s1090, 2048
        $region48: #{tpu_custom_call.1} parent=43 // pred_fallthru
          _
      $region44: #{tpu_custom_call.1} parent=5 // pred_fallthru
        _
    $region6: #{tpu_custom_call.1} parent=1 // loop_footer
      %s16 = sadd.s32 1, %s12
    $region7: #{tpu_custom_call.1} parent=1 // loop_footer_branch
      %11 = sbr.rel target = $region3
    $region8: #{tpu_custom_call.1} parent=1 // loop_exit
      _
    %1095 = vsyncpa [#allocation4], 1
    %s1096 = scalar_lea.sflag [#allocation4], 1
    %1097 = vsyncpa %s1096, 1

</llo_original>
